<compile_context>
chip_gen: v7x
topology: tpu7x:2x2x1
jax: 0.10.0
libtpu: 0.0.40
codegen_flags: <defaults>
</compile_context>

<pallas_src>
import math

import jax
import jax.numpy as jnp
from jax.experimental import pallas as pl
from jax.experimental.pallas import tpu as pltpu


_SQRT_HALF = 1.0 / math.sqrt(2.0)


def _gelu_exact(x):
    # nn.GELU() default: 0.5 * x * (1 + erf(x / sqrt(2)))
    return 0.5 * x * (1.0 + jax.lax.erf(x * _SQRT_HALF))


def _make_kernel(num_layers):
    """Fused (Linear + GELU) x num_layers on one grouped row tile."""

    def kernel(*refs):
        # refs = (x_ref, w1_ref, b1_ref, ..., wN_ref, bN_ref, o_ref)
        x_ref = refs[0]
        o_ref = refs[-1]
        h = x_ref[...]
        for layer in range(num_layers):
            w = refs[1 + 2 * layer][...]
            b = refs[2 + 2 * layer][...]
            # Single-pass MXU matmul (operands in the HBM-read dtype), f32 accumulation.
            h = jnp.dot(h.astype(w.dtype), w,
                        preferred_element_type=jnp.float32,
                        precision=jax.lax.Precision.DEFAULT)
            h = h + b                      # bias always f32
            h = _gelu_exact(h)             # exact erf, f32 (matches nn.GELU())
        o_ref[...] = h.astype(o_ref.dtype)

    return kernel


def _round_up(x, m):
    return pl.cdiv(x, m) * m


def _group_factor(dims, lanes=128):
    """Smallest G such that G*d is a multiple of the 128-lane vreg width for every d."""
    g = 1
    for d in dims:
        g = math.lcm(g, lanes // math.gcd(int(d), lanes))
    return g


def _block_diag(w, g):
    """(din, dout) -> (g*din, g*dout) with g copies of w on the block diagonal."""
    din, dout = w.shape
    eye = jnp.eye(g, dtype=w.dtype)
    return jnp.einsum("ij,kl->ikjl", eye, w).reshape(g * din, g * dout)


def dim_reduction_block(x, params, *, tile_rows=16384, compute_dtype=None):
    """Fused DimReductionBlock forward.

    x:      (B, S, D0) channels-last activations (nn.Linear acts on the last dim).
            Pass bf16 activations to halve HBM read traffic (output dtype follows x).
    params: sequence of (W, b) with W of shape (D_in, D_out); applied in order as
            gelu(h @ W + b), matching the PyTorch module.
    tile_rows: target flattened (B*S) rows per grid step (default 16384 -> ~2.5 MiB
            of HBM traffic per step, >=85% of roofline; VMEM stays ~6 MiB).
    compute_dtype: optional override for the x / W HBM-read dtype (e.g. jnp.bfloat16).
            Accumulation, biases and the GELU always stay in float32.
    """
    params = list(params)
    num_layers = len(params)
    assert num_layers >= 1
    B, S, D0 = x.shape
    assert params[0][0].shape[0] == D0
    dims = [D0] + [int(w.shape[1]) for (w, _) in params]
    d_out = dims[-1]
    M = B * S

    # Row-group factor: repacking G rows into one makes every last dim a multiple
    # of 128 lanes (unmasked vld/vst, lane-dense writeback DMA).
    G = _group_factor(dims)

    in_dtype = x.dtype if compute_dtype is None else compute_dtype
    out_dtype = x.dtype

    # ---- Zero-copy grouping (pad only when M is not a multiple of G) ----------------
    x2d = x.reshape(M, D0)
    pad_rows = (-M) % G
    if pad_rows:
        # TODO(synk): this < G-row zero pad still costs one extra XLA pass over x;
        # fully removing it needs an in-kernel regroup (strided sublane loads) for the
        # last partial group.  It does NOT trigger when (B*S) % 16 == 0.
        x2d = jnp.pad(x2d, ((0, pad_rows), (0, 0)))
    Mg = (M + pad_rows) // G
    x_g = x2d.reshape(Mg, G * D0).astype(in_dtype)   # bit-identical row-major repack

    # ---- Tile selection: big tiles, but keep >=2 (target ~4) grid steps -------------
    SUB = 16  # sublane-group granularity (covers f32 (8,128) and bf16 (16,128) packing)
    tm_target = max(SUB, (tile_rows // G) // SUB * SUB)
    if Mg <= 2 * SUB:
        tm_g = Mg                                             # tiny: one full-array block
    elif Mg <= tm_target:
        tm_g = _round_up(pl.cdiv(Mg, 2), SUB)                 # small: 2 steps for megacore
    else:
        tm_g = min(tm_target, _round_up(pl.cdiv(Mg, 4), SUB))  # large: >=4 steps, <=target
    grid = (pl.cdiv(Mg, tm_g),)   # ragged last block handled (masked) by Pallas

    # ---- Operands & specs ------------------------------------------------------------
    flat_args = [x_g]
    in_specs = [pl.BlockSpec((tm_g, G * D0), lambda i: (i, 0))]
    weight_bytes = 0
    for (w, b) in params:
        din, dout = w.shape
        w_blk = _block_diag(w, G).astype(in_dtype)
        b_blk = jnp.tile(b.astype(jnp.float32), G).reshape(1, G * dout)
        weight_bytes += w_blk.size * w_blk.dtype.itemsize + b_blk.size * 4
        flat_args += [w_blk, b_blk]
        # Constant operands (index_map always (0,0)) stay resident in VMEM across the
        # whole grid.  They are tiny (<0.7 MiB total), so default double-buffering is
        # negligible vs. the 16+ MiB scoped VMEM budget; pl.Buffered(1) deliberately
        # skipped to keep the lowering maximally portable.
        in_specs += [
            pl.BlockSpec((G * din, G * dout), lambda i: (0, 0)),
            pl.BlockSpec((1, G * dout), lambda i: (0, 0)),
        ]

    out_specs = pl.BlockSpec((tm_g, G * d_out), lambda i: (i, 0))
    out_shape = jax.ShapeDtypeStruct((Mg, G * d_out), out_dtype)

    # Advisory cost estimate: lets XLA treat the call as memory-bound.
    in_item = jnp.dtype(in_dtype).itemsize
    out_item = jnp.dtype(out_dtype).itemsize
    cost = pl.CostEstimate(
        flops=2 * Mg * sum((G * a) * (G * b) for a, b in zip(dims[:-1], dims[1:])),
        transcendentals=Mg * G * sum(dims[1:]),
        bytes_accessed=Mg * G * (D0 * in_item + d_out * out_item) + weight_bytes,
    )

    y_g = pl.pallas_call(
        _make_kernel(num_layers),
        out_shape=out_shape,
        grid_spec=pltpu.PrefetchScalarGridSpec(
            num_scalar_prefetch=0,
            grid=grid,
            in_specs=in_specs,
            out_specs=out_specs,
        ),
        compiler_params=pltpu.CompilerParams(
            # Row axis is embarrassingly parallel -> shards across both TCs on v7x.
            dimension_semantics=("parallel",),
        ),
        cost_estimate=cost,
    )(*flat_args)

    # Bit-identical (free) unpack back to rows; slice only if we had to group-pad.
    y2d = y_g.reshape(Mg * G, d_out)
    if pad_rows:
        y2d = y2d[:M]
    return y2d.reshape(B, S, d_out)


def init_linear_params(key, in_dim, out_dim):
    """Xavier-uniform weight (stored as (in, out)) + PyTorch-default bias."""
    kw, kb = jax.random.split(key)
    bound_w = math.sqrt(6.0 / (in_dim + out_dim))
    w = jax.random.uniform(kw, (in_dim, out_dim), jnp.float32, -bound_w, bound_w)
    bound_b = 1.0 / math.sqrt(in_dim)
    b = jax.random.uniform(kb, (out_dim,), jnp.float32, -bound_b, bound_b)
    return w, b


def reference(x, params):
    # Pure-JAX reference of the PyTorch forward (nn.Linear + nn.GELU() stack).
    h = x
    for (w, b) in params:
        h = jax.nn.gelu(h @ w + b, approximate=False)
    return h


# TODO(synk): optional rearrange_before / rearrange_after (einops Rearrange layers)
# are not part of the fused kernel; apply them outside if the module uses them.

if __name__ == "__main__":
    key = jax.random.PRNGKey(0)
    k_x, k_l1, k_l2 = jax.random.split(key, 3)

    # DimReductionBlock(list_of_input_output_tuples=[(32, 16), (16, 8)])
    tuples = [(32, 16), (16, 8)]
    params = [
        init_linear_params(k_l1, *tuples[0]),
        init_linear_params(k_l2, *tuples[1]),
    ]

    # f32 path (matches PyTorch numerics).  Shapes exercise: single tiny block,
    # group-ragged rows (M % 16 != 0 -> small pad path), block-ragged grid with NO
    # padding (M % 16 == 0, Mg % tm_g != 0), and the multi-step big-tile path.
    for (B, S) in [(2, 8), (3, 50), (2, 1000), (5, 777), (4, 8192)]:
        kx = jax.random.fold_in(k_x, B * 100000 + S)
        x = jax.random.normal(kx, (B, S, tuples[0][0]), jnp.float32)

        out = jax.block_until_ready(dim_reduction_block(x, params))
        ref = reference(x, params)

        assert out.shape == (B, S, tuples[-1][1])
        max_err = float(jnp.max(jnp.abs(out - ref)))
        assert jnp.allclose(out, ref, atol=1e-4, rtol=2e-4), (
            f"f32 max err {max_err} at B={B}, S={S}"
        )

    # bf16 HBM-read fast path: activations arrive in bf16 (halves the dominant read
    # traffic); accumulation, bias and GELU remain f32.  Looser tolerance vs the
    # f32 reference because the inputs/weights are rounded to bf16.
    B, S = 4, 333
    xb = jax.random.normal(jax.random.fold_in(k_x, 7), (B, S, tuples[0][0]), jnp.float32)
    out_bf16 = jax.block_until_ready(
        dim_reduction_block(xb.astype(jnp.bfloat16), params))
    ref_bf16 = reference(xb, params)
    assert out_bf16.shape == (B, S, tuples[-1][1])
    max_err_bf16 = float(jnp.max(jnp.abs(out_bf16.astype(jnp.float32) - ref_bf16)))
    assert max_err_bf16 < 5e-2, f"bf16 max err {max_err_bf16}"

    print("KERNEL_OK")
</pallas_src>

<mosaic_0001>
module attributes {stable_mosaic.version = 11 : i64} {
  func.func @kernel(%arg0: i32, %arg1: memref<1x512xf32, #tpu.memory_space<vmem>>, %arg2: memref<512x256xf32, #tpu.memory_space<vmem>>, %arg3: memref<1x256xf32, #tpu.memory_space<vmem>>, %arg4: memref<256x128xf32, #tpu.memory_space<vmem>>, %arg5: memref<1x128xf32, #tpu.memory_space<vmem>>, %arg6: memref<1x128xf32, #tpu.memory_space<vmem>>) attributes {dimension_semantics = [#tpu.dimension_semantics<parallel>], iteration_bounds = array<i64: 1>, scalar_prefetch = 0 : i64, scratch_operands = 0 : i64, tpu.core_type = #tpu.core_type<tc>, window_params = [{transform_indices = @transform_0, window_bounds = array<i64: 1, 512>}, {pipeline_mode = #tpu.pipeline_mode<synchronous>, transform_indices = @transform_1, window_bounds = array<i64: 512, 256>}, {pipeline_mode = #tpu.pipeline_mode<synchronous>, transform_indices = @transform_2, window_bounds = array<i64: 1, 256>}, {pipeline_mode = #tpu.pipeline_mode<synchronous>, transform_indices = @transform_3, window_bounds = array<i64: 256, 128>}, {pipeline_mode = #tpu.pipeline_mode<synchronous>, transform_indices = @transform_4, window_bounds = array<i64: 1, 128>}, {transform_indices = @transform_5, window_bounds = array<i64: 1, 128>}]} {
    %c0 = arith.constant 0 : index
    %c0_0 = arith.constant 0 : index
    %0 = vector.load %arg1[%c0, %c0_0] : memref<1x512xf32, #tpu.memory_space<vmem>>, vector<1x512xf32>
    %c0_1 = arith.constant 0 : index
    %c0_2 = arith.constant 0 : index
    %1 = vector.load %arg2[%c0_1, %c0_2] : memref<512x256xf32, #tpu.memory_space<vmem>>, vector<512x256xf32>
    %c0_3 = arith.constant 0 : index
    %c0_4 = arith.constant 0 : index
    %2 = vector.load %arg3[%c0_3, %c0_4] : memref<1x256xf32, #tpu.memory_space<vmem>>, vector<1x256xf32>
    %cst = arith.constant dense<0.000000e+00> : vector<1x256xf32>
    %3 = tpu.matmul %0, %1, %cst {dimension_numbers = #tpu.dot_dimension_numbers<[1], [0], [0], [1], [0, 0, 1, 1], [], []>} : vector<1x512xf32>, vector<512x256xf32>, vector<1x256xf32> -> vector<1x256xf32>
    %4 = arith.addf %3, %2 : vector<1x256xf32>
    %cst_5 = arith.constant 5.000000e-01 : f32
    %5 = vector.broadcast %cst_5 : f32 to vector<1x256xf32>
    %6 = arith.mulf %5, %4 : vector<1x256xf32>
    %cst_6 = arith.constant 0.707106769 : f32
    %7 = vector.broadcast %cst_6 : f32 to vector<1x256xf32>
    %8 = arith.mulf %4, %7 : vector<1x256xf32>
    %9 = math.erf %8 : vector<1x256xf32>
    %cst_7 = arith.constant 1.000000e+00 : f32
    %10 = vector.broadcast %cst_7 : f32 to vector<1x256xf32>
    %11 = arith.addf %10, %9 : vector<1x256xf32>
    %12 = arith.mulf %6, %11 : vector<1x256xf32>
    %c0_8 = arith.constant 0 : index
    %c0_9 = arith.constant 0 : index
    %13 = vector.load %arg4[%c0_8, %c0_9] : memref<256x128xf32, #tpu.memory_space<vmem>>, vector<256x128xf32>
    %c0_10 = arith.constant 0 : index
    %c0_11 = arith.constant 0 : index
    %14 = vector.load %arg5[%c0_10, %c0_11] : memref<1x128xf32, #tpu.memory_space<vmem>>, vector<1x128xf32>
    %cst_12 = arith.constant dense<0.000000e+00> : vector<1x128xf32>
    %15 = tpu.matmul %12, %13, %cst_12 {dimension_numbers = #tpu.dot_dimension_numbers<[1], [0], [0], [1], [0, 0, 1, 1], [], []>} : vector<1x256xf32>, vector<256x128xf32>, vector<1x128xf32> -> vector<1x128xf32>
    %16 = arith.addf %15, %14 : vector<1x128xf32>
    %cst_13 = arith.constant 5.000000e-01 : f32
    %17 = vector.broadcast %cst_13 : f32 to vector<1x128xf32>
    %18 = arith.mulf %17, %16 : vector<1x128xf32>
    %cst_14 = arith.constant 0.707106769 : f32
    %19 = vector.broadcast %cst_14 : f32 to vector<1x128xf32>
    %20 = arith.mulf %16, %19 : vector<1x128xf32>
    %21 = math.erf %20 : vector<1x128xf32>
    %cst_15 = arith.constant 1.000000e+00 : f32
    %22 = vector.broadcast %cst_15 : f32 to vector<1x128xf32>
    %23 = arith.addf %22, %21 : vector<1x128xf32>
    %24 = arith.mulf %18, %23 : vector<1x128xf32>
    %c0_16 = arith.constant 0 : index
    %c0_17 = arith.constant 0 : index
    %25 = vector.load %arg6[%c0_16, %c0_17] : memref<1x128xf32, #tpu.memory_space<vmem>>, vector<1x128xf32>
    tpu.vector_store %arg6[%c0_16, %c0_17], %24 {strides = array<i32>} : memref<1x128xf32, #tpu.memory_space<vmem>>, vector<1x128xf32>,
    return
  }
  func.func @transform_0(%arg0: i32) -> (i32, i32) {
    %c0_i32 = arith.constant 0 : i32
    %c0_i32_0 = arith.constant 0 : i32
    return %arg0, %c0_i32 : i32, i32
  }
  func.func @transform_1(%arg0: i32) -> (i32, i32) {
    %c0_i32 = arith.constant 0 : i32
    %c0_i32_0 = arith.constant 0 : i32
    %c0_i32_1 = arith.constant 0 : i32
    return %c0_i32, %c0_i32_0 : i32, i32
  }
  func.func @transform_2(%arg0: i32) -> (i32, i32) {
    %c0_i32 = arith.constant 0 : i32
    %c0_i32_0 = arith.constant 0 : i32
    %c0_i32_1 = arith.constant 0 : i32
    return %c0_i32, %c0_i32_0 : i32, i32
  }
  func.func @transform_3(%arg0: i32) -> (i32, i32) {
    %c0_i32 = arith.constant 0 : i32
    %c0_i32_0 = arith.constant 0 : i32
    %c0_i32_1 = arith.constant 0 : i32
    return %c0_i32, %c0_i32_0 : i32, i32
  }
  func.func @transform_4(%arg0: i32) -> (i32, i32) {
    %c0_i32 = arith.constant 0 : i32
    %c0_i32_0 = arith.constant 0 : i32
    %c0_i32_1 = arith.constant 0 : i32
    return %c0_i32, %c0_i32_0 : i32, i32
  }
  func.func @transform_5(%arg0: i32) -> (i32, i32) {
    %c0_i32 = arith.constant 0 : i32
    %c0_i32_0 = arith.constant 0 : i32
    return %arg0, %c0_i32 : i32, i32
  }
}

</mosaic_0001>

<llo_original>
// kernel: tpu_custom_call.1
$region0: #{tpu_custom_call.1}
  #allocation0 [shape = 'u32[]', space=smem, size = 0x4, offset = 0x4, fixed_abs, tag = 'smem constant byte address 0x4 - core index']
  #allocation1 [shape = 'u32[144,128]{1,0:T(1,128)}', space=vmem, size = 0x12000, scoped, tag = 'internal scratch']
  %s0 = inlined_call_operand.hbm [shape: f32[1,512], index: 0, kind: input, shape index: {}]
  %s1 = inlined_call_operand.hbm [shape: f32[512,256], index: 1, kind: input, shape index: {}]
  %s2 = inlined_call_operand.vmem [shape: f32[1,256], index: 2, kind: input, shape index: {}]
  %s3 = inlined_call_operand.hbm [shape: f32[256,128], index: 3, kind: input, shape index: {}]
  %s4 = inlined_call_operand.vmem [shape: f32[1,128], index: 4, kind: input, shape index: {}]
  %s5 = inlined_call_operand.hbm [shape: f32[1,128], index: 5, kind: output, shape index: {}]
  %s6 = sld [smem:[#allocation0]]
  $region42: #{tpu_custom_call.1} parent=0
    _
  %s8 = ssub.s32 1, %s6
  %s9 = scalar_select 0, %s8, %s6
  $region1: #{tpu_custom_call.1} parent=0
    #allocation2 [shape = 'u8[2048]{0}', space=vmem, size = 0x800, scoped, tag = 'input window, operand 0, single buffered']
    #allocation3 [shape = 's32[1]{0}', space=sflag, size = 0x4, scoped, tag = 'scoped memory for tpu_custom_call.1']
    #allocation4 [shape = 's32[1]{0}', space=sflag, size = 0x4, scoped, tag = 'scoped memory for tpu_custom_call.1']
    #allocation5 [shape = 'u8[524288]{0}', space=vmem, size = 0x80000, scoped, tag = 'input window, operand 1, single buffered']
    #allocation6 [shape = 's32[1]{0}', space=sflag, size = 0x4, scoped, tag = 'scoped memory for tpu_custom_call.1']
    #allocation7 [shape = 'u8[131072]{0}', space=vmem, size = 0x20000, scoped, tag = 'input window, operand 3, single buffered']
    #allocation8 [shape = 'u8[512]{0}', space=vmem, size = 0x400, scoped, tag = 'output window, operand 0, single buffered']
    %10 = vsyncpa [#allocation3], 0
    %11 = vsyncpa [#allocation6], 0
    %12 = vsyncpa [#allocation4], 0
    // Predicated region
    $region2: #{tpu_custom_call.1} parent=1 // pred_check
      _
    $region3: #{tpu_custom_call.1} parent=1 // pred_check_branch
      %14 = sbr.rel (0) target = $region5
    $region4: #{tpu_custom_call.1} parent=1 // pred_region
      %s16 = ssub.s32 64, 64
      %17 = vsyncadd [#allocation3], %s16
      %s19 = sshll.u32 [#allocation2], 4
      %s20 = int_to_ptr.vmem [resolvable:$true] %s19
      %22 = dma.hbm_to_vmem [thread:$0]  %s0, 64, %s20, [#allocation3]
    $region5: #{tpu_custom_call.1} parent=1 // pred_fallthru
      _
    // Predicated region
    $region6: #{tpu_custom_call.1} parent=1 // pred_check
      _
    $region7: #{tpu_custom_call.1} parent=1 // pred_check_branch
      %24 = sbr.rel (0) target = $region9
    $region8: #{tpu_custom_call.1} parent=1 // pred_region
      %s26 = ssub.s32 16384, 16384
      %27 = vsyncadd [#allocation6], %s26
      %s28 = sshll.u32 [#allocation5], 4
      %s29 = int_to_ptr.vmem [resolvable:$true] %s28
      %34 = dma.hbm_to_vmem [thread:$0]  %s1, 16384, %s29, [#allocation6], 256, 256, 16
    $region9: #{tpu_custom_call.1} parent=1 // pred_fallthru
      _
    // Predicated region
    $region10: #{tpu_custom_call.1} parent=1 // pred_check
      _
    $region11: #{tpu_custom_call.1} parent=1 // pred_check_branch
      %36 = sbr.rel (0) target = $region13
    $region12: #{tpu_custom_call.1} parent=1 // pred_region
      _
    $region13: #{tpu_custom_call.1} parent=1 // pred_fallthru
      _
    // Predicated region
    $region14: #{tpu_custom_call.1} parent=1 // pred_check
      _
    $region15: #{tpu_custom_call.1} parent=1 // pred_check_branch
      %38 = sbr.rel (0) target = $region17
    $region16: #{tpu_custom_call.1} parent=1 // pred_region
      %s40 = ssub.s32 4096, 4096
      %41 = vsyncadd [#allocation6], %s40
      %s42 = sshll.u32 [#allocation7], 4
      %s43 = int_to_ptr.vmem [resolvable:$true] %s42
      %48 = dma.hbm_to_vmem [thread:$0]  %s3, 4096, %s43, [#allocation6], 128, 128, 8
    $region17: #{tpu_custom_call.1} parent=1 // pred_fallthru
      _
    // Predicated region
    $region18: #{tpu_custom_call.1} parent=1 // pred_check
      _
    $region19: #{tpu_custom_call.1} parent=1 // pred_check_branch
      %50 = sbr.rel (0) target = $region21
    $region20: #{tpu_custom_call.1} parent=1 // pred_region
      _
    $region21: #{tpu_custom_call.1} parent=1 // pred_fallthru
      _
    // Predicated region
    $region22: #{tpu_custom_call.1} parent=1 // pred_check
      _
    $region23: #{tpu_custom_call.1} parent=1 // pred_check_branch
      %52 = sbr.rel (0) target = $region25
    $region24: #{tpu_custom_call.1} parent=1 // pred_region
      %53 = dma.done [#allocation3], 64
    $region25: #{tpu_custom_call.1} parent=1 // pred_fallthru
      _
    // Predicated region
    $region26: #{tpu_custom_call.1} parent=1 // pred_check
      _
    $region27: #{tpu_custom_call.1} parent=1 // pred_check_branch
      %55 = sbr.rel (0) target = $region29
    $region28: #{tpu_custom_call.1} parent=1 // pred_region
      %56 = dma.done [#allocation6], 16384
    $region29: #{tpu_custom_call.1} parent=1 // pred_fallthru
      _
    // Predicated region
    $region30: #{tpu_custom_call.1} parent=1 // pred_check
      _
    $region31: #{tpu_custom_call.1} parent=1 // pred_check_branch
      %58 = sbr.rel (0) target = $region33
    $region32: #{tpu_custom_call.1} parent=1 // pred_region
      %59 = dma.done [#allocation6], 4096
    $region33: #{tpu_custom_call.1} parent=1 // pred_fallthru
      _
    %v60 = vld [vmem:[#allocation2] sm:$0xf]
    %v61 = vld [vmem:[#allocation5] sm:$0xff]
    %v62 = vld [vmem:[#allocation5 + $0x8] sm:$0xff]
    %v63 = vld [vmem:[#allocation5 + $0x10] sm:$0xff]
    %v64 = vld [vmem:[#allocation5 + $0x18] sm:$0xff]
    %v65 = vld [vmem:[#allocation5 + $0x20] sm:$0xff]
    %v66 = vld [vmem:[#allocation5 + $0x28] sm:$0xff]
    %v67 = vld [vmem:[#allocation5 + $0x30] sm:$0xff]
    %v68 = vld [vmem:[#allocation5 + $0x38] sm:$0xff]
    %v69 = vld [vmem:[#allocation5 + $0x40] sm:$0xff]
    %v70 = vld [vmem:[#allocation5 + $0x48] sm:$0xff]
    %v71 = vld [vmem:[#allocation5 + $0x50] sm:$0xff]
    %v72 = vld [vmem:[#allocation5 + $0x58] sm:$0xff]
    %v73 = vld [vmem:[#allocation5 + $0x60] sm:$0xff]
    %v74 = vld [vmem:[#allocation5 + $0x68] sm:$0xff]
    %v75 = vld [vmem:[#allocation5 + $0x70] sm:$0xff]
    %v76 = vld [vmem:[#allocation5 + $0x78] sm:$0xff]
    %v77 = vld [vmem:[#allocation5 + $0x80] sm:$0xff]
    %v78 = vld [vmem:[#allocation5 + $0x88] sm:$0xff]
    %v79 = vld [vmem:[#allocation5 + $0x90] sm:$0xff]
    %v80 = vld [vmem:[#allocation5 + $0x98] sm:$0xff]
    %v81 = vld [vmem:[#allocation5 + $0xa0] sm:$0xff]
    %v82 = vld [vmem:[#allocation5 + $0xa8] sm:$0xff]
    %v83 = vld [vmem:[#allocation5 + $0xb0] sm:$0xff]
    %v84 = vld [vmem:[#allocation5 + $0xb8] sm:$0xff]
    %v85 = vld [vmem:[#allocation5 + $0xc0] sm:$0xff]
    %v86 = vld [vmem:[#allocation5 + $0xc8] sm:$0xff]
    %v87 = vld [vmem:[#allocation5 + $0xd0] sm:$0xff]
    %v88 = vld [vmem:[#allocation5 + $0xd8] sm:$0xff]
    %v89 = vld [vmem:[#allocation5 + $0xe0] sm:$0xff]
    %v90 = vld [vmem:[#allocation5 + $0xe8] sm:$0xff]
    %v91 = vld [vmem:[#allocation5 + $0xf0] sm:$0xff]
    %v92 = vld [vmem:[#allocation5 + $0xf8] sm:$0xff]
    %v93 = vld [vmem:[#allocation5 + $0x100] sm:$0xff]
    %v94 = vld [vmem:[#allocation5 + $0x108] sm:$0xff]
    %v95 = vld [vmem:[#allocation5 + $0x110] sm:$0xff]
    %v96 = vld [vmem:[#allocation5 + $0x118] sm:$0xff]
    %v97 = vld [vmem:[#allocation5 + $0x120] sm:$0xff]
    %v98 = vld [vmem:[#allocation5 + $0x128] sm:$0xff]
    %v99 = vld [vmem:[#allocation5 + $0x130] sm:$0xff]
    %v100 = vld [vmem:[#allocation5 + $0x138] sm:$0xff]
    %v101 = vld [vmem:[#allocation5 + $0x140] sm:$0xff]
    %v102 = vld [vmem:[#allocation5 + $0x148] sm:$0xff]
    %v103 = vld [vmem:[#allocation5 + $0x150] sm:$0xff]
    %v104 = vld [vmem:[#allocation5 + $0x158] sm:$0xff]
    %v105 = vld [vmem:[#allocation5 + $0x160] sm:$0xff]
    %v106 = vld [vmem:[#allocation5 + $0x168] sm:$0xff]
    %v107 = vld [vmem:[#allocation5 + $0x170] sm:$0xff]
    %v108 = vld [vmem:[#allocation5 + $0x178] sm:$0xff]
    %v109 = vld [vmem:[#allocation5 + $0x180] sm:$0xff]
    %v110 = vld [vmem:[#allocation5 + $0x188] sm:$0xff]
    %v111 = vld [vmem:[#allocation5 + $0x190] sm:$0xff]
    %v112 = vld [vmem:[#allocation5 + $0x198] sm:$0xff]
    %v113 = vld [vmem:[#allocation5 + $0x1a0] sm:$0xff]
    %v114 = vld [vmem:[#allocation5 + $0x1a8] sm:$0xff]
    %v115 = vld [vmem:[#allocation5 + $0x1b0] sm:$0xff]
    %v116 = vld [vmem:[#allocation5 + $0x1b8] sm:$0xff]
    %v117 = vld [vmem:[#allocation5 + $0x1c0] sm:$0xff]
    %v118 = vld [vmem:[#allocation5 + $0x1c8] sm:$0xff]
    %v119 = vld [vmem:[#allocation5 + $0x1d0] sm:$0xff]
    %v120 = vld [vmem:[#allocation5 + $0x1d8] sm:$0xff]
    %v121 = vld [vmem:[#allocation5 + $0x1e0] sm:$0xff]
    %v122 = vld [vmem:[#allocation5 + $0x1e8] sm:$0xff]
    %v123 = vld [vmem:[#allocation5 + $0x1f0] sm:$0xff]
    %v124 = vld [vmem:[#allocation5 + $0x1f8] sm:$0xff]
    %v125 = vld [vmem:[#allocation5 + $0x200] sm:$0xff]
    %v126 = vld [vmem:[#allocation5 + $0x208] sm:$0xff]
    %v127 = vld [vmem:[#allocation5 + $0x210] sm:$0xff]
    %v128 = vld [vmem:[#allocation5 + $0x218] sm:$0xff]
    %v129 = vld [vmem:[#allocation5 + $0x220] sm:$0xff]
    %v130 = vld [vmem:[#allocation5 + $0x228] sm:$0xff]
    %v131 = vld [vmem:[#allocation5 + $0x230] sm:$0xff]
    %v132 = vld [vmem:[#allocation5 + $0x238] sm:$0xff]
    %v133 = vld [vmem:[#allocation5 + $0x240] sm:$0xff]
    %v134 = vld [vmem:[#allocation5 + $0x248] sm:$0xff]
    %v135 = vld [vmem:[#allocation5 + $0x250] sm:$0xff]
    %v136 = vld [vmem:[#allocation5 + $0x258] sm:$0xff]
    %v137 = vld [vmem:[#allocation5 + $0x260] sm:$0xff]
    %v138 = vld [vmem:[#allocation5 + $0x268] sm:$0xff]
    %v139 = vld [vmem:[#allocation5 + $0x270] sm:$0xff]
    %v140 = vld [vmem:[#allocation5 + $0x278] sm:$0xff]
    %v141 = vld [vmem:[#allocation5 + $0x280] sm:$0xff]
    %v142 = vld [vmem:[#allocation5 + $0x288] sm:$0xff]
    %v143 = vld [vmem:[#allocation5 + $0x290] sm:$0xff]
    %v144 = vld [vmem:[#allocation5 + $0x298] sm:$0xff]
    %v145 = vld [vmem:[#allocation5 + $0x2a0] sm:$0xff]
    %v146 = vld [vmem:[#allocation5 + $0x2a8] sm:$0xff]
    %v147 = vld [vmem:[#allocation5 + $0x2b0] sm:$0xff]
    %v148 = vld [vmem:[#allocation5 + $0x2b8] sm:$0xff]
    %v149 = vld [vmem:[#allocation5 + $0x2c0] sm:$0xff]
    %v150 = vld [vmem:[#allocation5 + $0x2c8] sm:$0xff]
    %v151 = vld [vmem:[#allocation5 + $0x2d0] sm:$0xff]
    %v152 = vld [vmem:[#allocation5 + $0x2d8] sm:$0xff]
    %v153 = vld [vmem:[#allocation5 + $0x2e0] sm:$0xff]
    %v154 = vld [vmem:[#allocation5 + $0x2e8] sm:$0xff]
    %v155 = vld [vmem:[#allocation5 + $0x2f0] sm:$0xff]
    %v156 = vld [vmem:[#allocation5 + $0x2f8] sm:$0xff]
    %v157 = vld [vmem:[#allocation5 + $0x300] sm:$0xff]
    %v158 = vld [vmem:[#allocation5 + $0x308] sm:$0xff]
    %v159 = vld [vmem:[#allocation5 + $0x310] sm:$0xff]
    %v160 = vld [vmem:[#allocation5 + $0x318] sm:$0xff]
    %v161 = vld [vmem:[#allocation5 + $0x320] sm:$0xff]
    %v162 = vld [vmem:[#allocation5 + $0x328] sm:$0xff]
    %v163 = vld [vmem:[#allocation5 + $0x330] sm:$0xff]
    %v164 = vld [vmem:[#allocation5 + $0x338] sm:$0xff]
    %v165 = vld [vmem:[#allocation5 + $0x340] sm:$0xff]
    %v166 = vld [vmem:[#allocation5 + $0x348] sm:$0xff]
    %v167 = vld [vmem:[#allocation5 + $0x350] sm:$0xff]
    %v168 = vld [vmem:[#allocation5 + $0x358] sm:$0xff]
    %v169 = vld [vmem:[#allocation5 + $0x360] sm:$0xff]
    %v170 = vld [vmem:[#allocation5 + $0x368] sm:$0xff]
    %v171 = vld [vmem:[#allocation5 + $0x370] sm:$0xff]
    %v172 = vld [vmem:[#allocation5 + $0x378] sm:$0xff]
    %v173 = vld [vmem:[#allocation5 + $0x380] sm:$0xff]
    %v174 = vld [vmem:[#allocation5 + $0x388] sm:$0xff]
    %v175 = vld [vmem:[#allocation5 + $0x390] sm:$0xff]
    %v176 = vld [vmem:[#allocation5 + $0x398] sm:$0xff]
    %v177 = vld [vmem:[#allocation5 + $0x3a0] sm:$0xff]
    %v178 = vld [vmem:[#allocation5 + $0x3a8] sm:$0xff]
    %v179 = vld [vmem:[#allocation5 + $0x3b0] sm:$0xff]
    %v180 = vld [vmem:[#allocation5 + $0x3b8] sm:$0xff]
    %v181 = vld [vmem:[#allocation5 + $0x3c0] sm:$0xff]
    %v182 = vld [vmem:[#allocation5 + $0x3c8] sm:$0xff]
    %v183 = vld [vmem:[#allocation5 + $0x3d0] sm:$0xff]
    %v184 = vld [vmem:[#allocation5 + $0x3d8] sm:$0xff]
    %v185 = vld [vmem:[#allocation5 + $0x3e0] sm:$0xff]
    %v186 = vld [vmem:[#allocation5 + $0x3e8] sm:$0xff]
    %v187 = vld [vmem:[#allocation5 + $0x3f0] sm:$0xff]
    %v188 = vld [vmem:[#allocation5 + $0x3f8] sm:$0xff]
    %v189 = vld [vmem:[%s2] sm:$0x3]
    %v191 = vlaneseq
    %v192 = vshrl.u32 %v191, 7
    %v193 = vsub.s32 0, %v192
    %v194 = vrot.slane %v60, %v193
    %v195 = vlaneseq
    %v196 = vshrl.u32 %v195, 7
    %v197 = vsub.s32 1, %v196
    %v198 = vrot.slane %v60, %v197
    %v199 = vlaneseq
    %v200 = vshrl.u32 %v199, 7
    %v201 = vsub.s32 2, %v200
    %v202 = vrot.slane %v60, %v201
    %v203 = vlaneseq
    %v204 = vshrl.u32 %v203, 7
    %v205 = vsub.s32 3, %v204
    %v206 = vrot.slane %v60, %v205
    %v212 = vlaneseq
    %v213 = vshrl.u32 %v212, 7
    %v214 = vsub.s32 0, %v213
    %v215 = vrot.slane %v189, %v214
    %v216 = vlaneseq
    %v217 = vshrl.u32 %v216, 7
    %v218 = vsub.s32 1, %v217
    %v219 = vrot.slane %v189, %v218
    %222 = vmatprep.subr.mxu0 %v62
    %223 = vmatpush1.msra.mxu0 %v61
    %224 = vmatprep.subr.mxu0 %v64
    %225 = vmatpush1.msra.mxu0 %v63
    %226 = vmatprep.subr.mxu0 %v66
    %227 = vmatpush1.msra.mxu0 %v65
    %228 = vmatprep.subr.mxu0 %v68
    %229 = vmatpush1.msra.mxu0 %v67
    %230 = vmatprep.subr.mxu0 %v70
    %231 = vmatpush1.msra.mxu0 %v69
    %232 = vmatprep.subr.mxu0 %v72
    %233 = vmatpush1.msra.mxu0 %v71
    %234 = vmatprep.subr.mxu0 %v74
    %235 = vmatpush1.msra.mxu0 %v73
    %236 = vmatprep.subr.mxu0 %v76
    %237 = vmatpush1.msra.mxu0 %v75
    %238 = vmatprep.subr.mxu0 %v78
    %239 = vmatpush1.msra.mxu0 %v77
    %240 = vmatprep.subr.mxu0 %v80
    %241 = vmatpush1.msra.mxu0 %v79
    %242 = vmatprep.subr.mxu0 %v82
    %243 = vmatpush1.msra.mxu0 %v81
    %244 = vmatprep.subr.mxu0 %v84
    %245 = vmatpush1.msra.mxu0 %v83
    %246 = vmatprep.subr.mxu0 %v86
    %247 = vmatpush1.msra.mxu0 %v85
    %248 = vmatprep.subr.mxu0 %v88
    %249 = vmatpush1.msra.mxu0 %v87
    %250 = vmatprep.subr.mxu0 %v90
    %251 = vmatpush1.msra.mxu0 %v89
    %252 = vmatprep.subr.mxu0 %v92
    %253 = vmatpush1.msra.mxu0 %v91
    %254 = vmatprep.subr.mxu0 %v94
    %255 = vmatpush1.msra.mxu0 %v93
    %256 = vmatprep.subr.mxu0 %v96
    %257 = vmatpush1.msra.mxu0 %v95
    %258 = vmatprep.subr.mxu0 %v98
    %259 = vmatpush1.msra.mxu0 %v97
    %260 = vmatprep.subr.mxu0 %v100
    %261 = vmatpush1.msra.mxu0 %v99
    %262 = vmatprep.subr.mxu0 %v102
    %263 = vmatpush1.msra.mxu0 %v101
    %264 = vmatprep.subr.mxu0 %v104
    %265 = vmatpush1.msra.mxu0 %v103
    %266 = vmatprep.subr.mxu0 %v106
    %267 = vmatpush1.msra.mxu0 %v105
    %268 = vmatprep.subr.mxu0 %v108
    %269 = vmatpush1.msra.mxu0 %v107
    %270 = vmatprep.subr.mxu0 %v110
    %271 = vmatpush1.msra.mxu0 %v109
    %272 = vmatprep.subr.mxu0 %v112
    %273 = vmatpush1.msra.mxu0 %v111
    %274 = vmatprep.subr.mxu0 %v114
    %275 = vmatpush1.msra.mxu0 %v113
    %276 = vmatprep.subr.mxu0 %v116
    %277 = vmatpush1.msra.mxu0 %v115
    %278 = vmatprep.subr.mxu0 %v118
    %279 = vmatpush1.msra.mxu0 %v117
    %280 = vmatprep.subr.mxu0 %v120
    %281 = vmatpush1.msra.mxu0 %v119
    %282 = vmatprep.subr.mxu0 %v122
    %283 = vmatpush1.msra.mxu0 %v121
    %284 = vmatprep.subr.mxu0 %v124
    %285 = vmatpush1.msra.mxu0 %v123
    %286 = vmatprep.mubr.f32.mxu0 %v198
    %287 = vmatmul.mubr.f32.gmra.mrb[0].mxu0 %v194
    %v288 = vpop.f32.mrb[0].mxu0
    %v289 = vadd.f32 %v215, %v288
    %v290 = vpop.f32.mrb[0].mxu0
    %v291 = vadd.f32 %v219, %v290
    %292 = vdwg.mxu0
    %293 = vmatprep.subr.mxu0 %v126
    %294 = vmatpush1.msra.mxu0 %v125
    %295 = vmatprep.subr.mxu0 %v128
    %296 = vmatpush1.msra.mxu0 %v127
    %297 = vmatprep.subr.mxu0 %v130
    %298 = vmatpush1.msra.mxu0 %v129
    %299 = vmatprep.subr.mxu0 %v132
    %300 = vmatpush1.msra.mxu0 %v131
    %301 = vmatprep.subr.mxu0 %v134
    %302 = vmatpush1.msra.mxu0 %v133
    %303 = vmatprep.subr.mxu0 %v136
    %304 = vmatpush1.msra.mxu0 %v135
    %305 = vmatprep.subr.mxu0 %v138
    %306 = vmatpush1.msra.mxu0 %v137
    %307 = vmatprep.subr.mxu0 %v140
    %308 = vmatpush1.msra.mxu0 %v139
    %309 = vmatprep.subr.mxu0 %v142
    %310 = vmatpush1.msra.mxu0 %v141
    %311 = vmatprep.subr.mxu0 %v144
    %312 = vmatpush1.msra.mxu0 %v143
    %313 = vmatprep.subr.mxu0 %v146
    %314 = vmatpush1.msra.mxu0 %v145
    %315 = vmatprep.subr.mxu0 %v148
    %316 = vmatpush1.msra.mxu0 %v147
    %317 = vmatprep.subr.mxu0 %v150
    %318 = vmatpush1.msra.mxu0 %v149
    %319 = vmatprep.subr.mxu0 %v152
    %320 = vmatpush1.msra.mxu0 %v151
    %321 = vmatprep.subr.mxu0 %v154
    %322 = vmatpush1.msra.mxu0 %v153
    %323 = vmatprep.subr.mxu0 %v156
    %324 = vmatpush1.msra.mxu0 %v155
    %325 = vmatprep.subr.mxu0 %v158
    %326 = vmatpush1.msra.mxu0 %v157
    %327 = vmatprep.subr.mxu0 %v160
    %328 = vmatpush1.msra.mxu0 %v159
    %329 = vmatprep.subr.mxu0 %v162
    %330 = vmatpush1.msra.mxu0 %v161
    %331 = vmatprep.subr.mxu0 %v164
    %332 = vmatpush1.msra.mxu0 %v163
    %333 = vmatprep.subr.mxu0 %v166
    %334 = vmatpush1.msra.mxu0 %v165
    %335 = vmatprep.subr.mxu0 %v168
    %336 = vmatpush1.msra.mxu0 %v167
    %337 = vmatprep.subr.mxu0 %v170
    %338 = vmatpush1.msra.mxu0 %v169
    %339 = vmatprep.subr.mxu0 %v172
    %340 = vmatpush1.msra.mxu0 %v171
    %341 = vmatprep.subr.mxu0 %v174
    %342 = vmatpush1.msra.mxu0 %v173
    %343 = vmatprep.subr.mxu0 %v176
    %344 = vmatpush1.msra.mxu0 %v175
    %345 = vmatprep.subr.mxu0 %v178
    %346 = vmatpush1.msra.mxu0 %v177
    %347 = vmatprep.subr.mxu0 %v180
    %348 = vmatpush1.msra.mxu0 %v179
    %349 = vmatprep.subr.mxu0 %v182
    %350 = vmatpush1.msra.mxu0 %v181
    %351 = vmatprep.subr.mxu0 %v184
    %352 = vmatpush1.msra.mxu0 %v183
    %353 = vmatprep.subr.mxu0 %v186
    %354 = vmatpush1.msra.mxu0 %v185
    %355 = vmatprep.subr.mxu0 %v188
    %356 = vmatpush1.msra.mxu0 %v187
    %357 = vmatprep.mubr.f32.mxu0 %v206
    %358 = vmatmul.mubr.f32.gmra.mrb[0].mxu0 %v202
    %v359 = vpop.f32.mrb[0].mxu0
    %v360 = vadd.f32 %v289, %v359
    %v361 = vpop.f32.mrb[0].mxu0
    %v362 = vadd.f32 %v291, %v361
    %363 = vdwg.mxu0
    %v364 = vmul.f32 %v360, 0.5
    %v365 = vmul.f32 %v362, 0.5
    %v366 = vmul.f32 %v360, 0.70710677
    %v367 = vmul.f32 %v362, 0.70710677
    %v368 = verf.f32.pop %v366
    %v369 = verf.f32.pop %v367
    %v370 = vadd.f32 %v368, 1.0
    %v371 = vadd.f32 %v369, 1.0
    %v372 = vmul.f32 %v364, %v370
    %v373 = vmul.f32 %v365, %v371
    %v374 = vld [vmem:[#allocation7] sm:$0xff]
    %v375 = vld [vmem:[#allocation7 + $0x8] sm:$0xff]
    %v376 = vld [vmem:[#allocation7 + $0x10] sm:$0xff]
    %v377 = vld [vmem:[#allocation7 + $0x18] sm:$0xff]
    %v378 = vld [vmem:[#allocation7 + $0x20] sm:$0xff]
    %v379 = vld [vmem:[#allocation7 + $0x28] sm:$0xff]
    %v380 = vld [vmem:[#allocation7 + $0x30] sm:$0xff]
    %v381 = vld [vmem:[#allocation7 + $0x38] sm:$0xff]
    %v382 = vld [vmem:[#allocation7 + $0x40] sm:$0xff]
    %v383 = vld [vmem:[#allocation7 + $0x48] sm:$0xff]
    %v384 = vld [vmem:[#allocation7 + $0x50] sm:$0xff]
    %v385 = vld [vmem:[#allocation7 + $0x58] sm:$0xff]
    %v386 = vld [vmem:[#allocation7 + $0x60] sm:$0xff]
    %v387 = vld [vmem:[#allocation7 + $0x68] sm:$0xff]
    %v388 = vld [vmem:[#allocation7 + $0x70] sm:$0xff]
    %v389 = vld [vmem:[#allocation7 + $0x78] sm:$0xff]
    %v390 = vld [vmem:[#allocation7 + $0x80] sm:$0xff]
    %v391 = vld [vmem:[#allocation7 + $0x88] sm:$0xff]
    %v392 = vld [vmem:[#allocation7 + $0x90] sm:$0xff]
    %v393 = vld [vmem:[#allocation7 + $0x98] sm:$0xff]
    %v394 = vld [vmem:[#allocation7 + $0xa0] sm:$0xff]
    %v395 = vld [vmem:[#allocation7 + $0xa8] sm:$0xff]
    %v396 = vld [vmem:[#allocation7 + $0xb0] sm:$0xff]
    %v397 = vld [vmem:[#allocation7 + $0xb8] sm:$0xff]
    %v398 = vld [vmem:[#allocation7 + $0xc0] sm:$0xff]
    %v399 = vld [vmem:[#allocation7 + $0xc8] sm:$0xff]
    %v400 = vld [vmem:[#allocation7 + $0xd0] sm:$0xff]
    %v401 = vld [vmem:[#allocation7 + $0xd8] sm:$0xff]
    %v402 = vld [vmem:[#allocation7 + $0xe0] sm:$0xff]
    %v403 = vld [vmem:[#allocation7 + $0xe8] sm:$0xff]
    %v404 = vld [vmem:[#allocation7 + $0xf0] sm:$0xff]
    %v405 = vld [vmem:[#allocation7 + $0xf8] sm:$0xff]
    %v406 = vld [vmem:[%s4] sm:$0x1]
    %407 = vmatprep.subr.mxu0 0.0
    %408 = vmatpush1.msra.mxu0 %v374
    %409 = vmatprep.subr.mxu0 0.0
    %410 = vmatpush1.msra.mxu0 %v375
    %411 = vmatprep.subr.mxu0 0.0
    %412 = vmatpush1.msra.mxu0 %v376
    %413 = vmatprep.subr.mxu0 0.0
    %414 = vmatpush1.msra.mxu0 %v377
    %415 = vmatprep.subr.mxu0 0.0
    %416 = vmatpush1.msra.mxu0 %v378
    %417 = vmatprep.subr.mxu0 0.0
    %418 = vmatpush1.msra.mxu0 %v379
    %419 = vmatprep.subr.mxu0 0.0
    %420 = vmatpush1.msra.mxu0 %v380
    %421 = vmatprep.subr.mxu0 0.0
    %422 = vmatpush1.msra.mxu0 %v381
    %423 = vmatprep.subr.mxu0 0.0
    %424 = vmatpush1.msra.mxu0 %v382
    %425 = vmatprep.subr.mxu0 0.0
    %426 = vmatpush1.msra.mxu0 %v383
    %427 = vmatprep.subr.mxu0 0.0
    %428 = vmatpush1.msra.mxu0 %v384
    %429 = vmatprep.subr.mxu0 0.0
    %430 = vmatpush1.msra.mxu0 %v385
    %431 = vmatprep.subr.mxu0 0.0
    %432 = vmatpush1.msra.mxu0 %v386
    %433 = vmatprep.subr.mxu0 0.0
    %434 = vmatpush1.msra.mxu0 %v387
    %435 = vmatprep.subr.mxu0 0.0
    %436 = vmatpush1.msra.mxu0 %v388
    %437 = vmatprep.subr.mxu0 0.0
    %438 = vmatpush1.msra.mxu0 %v389
    %439 = vmatprep.subr.mxu0 0.0
    %440 = vmatpush1.msra.mxu0 %v390
    %441 = vmatprep.subr.mxu0 0.0
    %442 = vmatpush1.msra.mxu0 %v391
    %443 = vmatprep.subr.mxu0 0.0
    %444 = vmatpush1.msra.mxu0 %v392
    %445 = vmatprep.subr.mxu0 0.0
    %446 = vmatpush1.msra.mxu0 %v393
    %447 = vmatprep.subr.mxu0 0.0
    %448 = vmatpush1.msra.mxu0 %v394
    %449 = vmatprep.subr.mxu0 0.0
    %450 = vmatpush1.msra.mxu0 %v395
    %451 = vmatprep.subr.mxu0 0.0
    %452 = vmatpush1.msra.mxu0 %v396
    %453 = vmatprep.subr.mxu0 0.0
    %454 = vmatpush1.msra.mxu0 %v397
    %455 = vmatprep.subr.mxu0 0.0
    %456 = vmatpush1.msra.mxu0 %v398
    %457 = vmatprep.subr.mxu0 0.0
    %458 = vmatpush1.msra.mxu0 %v399
    %459 = vmatprep.subr.mxu0 0.0
    %460 = vmatpush1.msra.mxu0 %v400
    %461 = vmatprep.subr.mxu0 0.0
    %462 = vmatpush1.msra.mxu0 %v401
    %463 = vmatprep.subr.mxu0 0.0
    %464 = vmatpush1.msra.mxu0 %v402
    %465 = vmatprep.subr.mxu0 0.0
    %466 = vmatpush1.msra.mxu0 %v403
    %467 = vmatprep.subr.mxu0 0.0
    %468 = vmatpush1.msra.mxu0 %v404
    %469 = vmatprep.subr.mxu0 0.0
    %470 = vmatpush1.msra.mxu0 %v405
    %471 = vmatprep.mubr.f32.mxu0 %v373
    %472 = vmatmul.mubr.f32.gmra.mrb[0].mxu0 %v372
    %v473 = vpop.f32.mrb[0].mxu0
    %v474 = vadd.f32 %v406, %v473
    %v475 = vpop.f32.mrb[0].mxu0
    %476 = vdwg.mxu0
    %v477 = vmul.f32 %v474, 0.5
    %v478 = vmul.f32 %v474, 0.70710677
    %v479 = verf.f32.pop %v478
    %v480 = vadd.f32 %v479, 1.0
    %v481 = vmul.f32 %v477, %v480
    %482 = vst [vmem:[#allocation8] sm:$0x1] %v481
    // Predicated region
    $region34: #{tpu_custom_call.1} parent=1 // pred_check
      _
    $region35: #{tpu_custom_call.1} parent=1 // pred_check_branch
      %484 = sbr.rel (0) target = $region37
    $region36: #{tpu_custom_call.1} parent=1 // pred_region
      %s486 = ssub.s32 16, 16
      %487 = vsyncadd [#allocation4], %s486
      %s489 = sshll.u32 [#allocation8], 4
      %s490 = int_to_ptr.vmem [resolvable:$true] %s489
      %492 = dma.vmem_to_hbm [thread:$0]  %s490, 16, %s5, [#allocation4]
    $region37: #{tpu_custom_call.1} parent=1 // pred_fallthru
      _
    // Predicated region
    $region38: #{tpu_custom_call.1} parent=1 // pred_check
      _
    $region39: #{tpu_custom_call.1} parent=1 // pred_check_branch
      %494 = sbr.rel (0) target = $region41
    $region40: #{tpu_custom_call.1} parent=1 // pred_region
      %495 = dma.done [#allocation4], 16
    $region41: #{tpu_custom_call.1} parent=1 // pred_fallthru
      _
    %496 = vsyncpa [#allocation3], 1
    %497 = vsyncpa [#allocation6], 1
    %498 = vsyncpa [#allocation4], 1

</llo_original>
